<compile_context>
chip_gen: v5e
topology: v5e:2x2
jax: 0.10.0
libtpu: 0.0.40
codegen_flags: <defaults>
</compile_context>

<pallas_src>
import functools
import math

import jax
import jax.numpy as jnp
from jax import lax
from jax.experimental import pallas as pl
from jax.experimental.pallas import tpu as pltpu


def _mha_kernel(q_ref, k_ref, v_ref, wk_ref, bk_ref, wo_ref, bo_ref, o_ref,
                kp_ref, vp_ref, ctx_ref, *, heads, head_dim, inv_scale):
    qi = pl.program_id(1)        # query-tile index (innermost, "arbitrary")
    S = k_ref.shape[1]           # full key/value length

    wk_t = wk_ref[...]           # (H, H) bf16, (in, out) layout
    bk = bk_ref[...]             # (1, H) f32
    wo_t = wo_ref[...]           # (H, H) bf16, (in, out) layout
    bo = bo_ref[...]             # (1, H) f32

    # ---- K/V projection: once per batch (qi == 0), cached in bf16 VMEM scratch ---
    @pl.when(qi == 0)
    def _():
        kv = jnp.concatenate([k_ref[0].astype(jnp.bfloat16),
                              v_ref[0].astype(jnp.bfloat16)], axis=0)     # (2S, H)
        kv_p = jnp.dot(kv, wk_t, preferred_element_type=jnp.float32) + bk # (2S, H) f32
        kp_ref[...] = kv_p[:S].astype(jnp.bfloat16)
        vp_ref[...] = kv_p[S:].astype(jnp.bfloat16)

    # ---- Q projection (every query tile), 1/sqrt(d) folded in once ---------------
    q = q_ref[0].astype(jnp.bfloat16)                                     # (tq, H)
    qp = (jnp.dot(q, wk_t, preferred_element_type=jnp.float32) + bk) * inv_scale

    # ---- per-head attention; ctx stored into the lane-concat scratch -------------
    # Static loop kept intentionally: heads is small, head_dim (=32) lane offsets
    # are not 128-aligned (dynamic pl.ds lane slicing would need masked access),
    # and each head's intermediates die at the ctx store within the iteration.
    for h in range(heads):
        lo = h * head_dim
        qh = qp[:, lo:lo + head_dim].astype(jnp.bfloat16)   # (tq, d)
        kh = kp_ref[:, lo:lo + head_dim]                    # (S,  d) bf16
        vh = vp_ref[:, lo:lo + head_dim]                    # (S,  d) bf16

        # energy = qh @ kh^T (contract last dims; no materialized transpose)
        energy = lax.dot_general(qh, kh, (((1,), (1,)), ((), ())),
                                 preferred_element_type=jnp.float32)      # (tq, S)

        # mask is None in this configuration; softmax over keys in f32.
        m = jnp.max(energy, axis=-1, keepdims=True)
        p = jnp.exp(energy - m)
        attn = p * pl.reciprocal(jnp.sum(p, axis=-1, keepdims=True), approx=True)
        # TODO(synk): dropout on `attn` omitted (eval-mode / identity semantics).

        ctx_ref[:, lo:lo + head_dim] = jnp.dot(
            attn.astype(jnp.bfloat16), vh, preferred_element_type=jnp.float32)

    # ---- one fused output projection (full K = H MXU depth) + single bias add ----
    out = jnp.dot(ctx_ref[...].astype(jnp.bfloat16), wo_t,
                  preferred_element_type=jnp.float32) + bo                # (tq, H)
    o_ref[0] = out.astype(o_ref.dtype)


def _pick_tq(sq, cap=256):
    """Largest query tile <= cap that divides Sq and satisfies the (8,128) rule."""
    if sq <= cap:
        return sq
    for t in range(cap, 0, -1):
        if sq % t == 0 and t % 8 == 0:
            return t
    # TODO(synk): pad + mask the last query tile instead of one oversized tile.
    return sq


def multi_head_attention(query, key, value, w_k, b_k, w_o, b_o, *, heads):
    B, S, H = key.shape
    Sq = query.shape[1]
    head_dim = H // heads
    inv_scale = 1.0 / math.sqrt(float(head_dim))

    tq = _pick_tq(Sq)
    nq = Sq // tq

    # Pre-transpose weights on host (no in-kernel .T) and cast to bf16 MXU operands.
    wk_t = jnp.asarray(w_k.T, dtype=jnp.bfloat16)     # (in, out)
    wo_t = jnp.asarray(w_o.T, dtype=jnp.bfloat16)     # (in, out)
    bk2 = b_k.reshape(1, H).astype(jnp.float32)
    bo2 = b_o.reshape(1, H).astype(jnp.float32)

    kernel = functools.partial(_mha_kernel, heads=heads, head_dim=head_dim,
                               inv_scale=inv_scale)

    return pl.pallas_call(
        kernel,
        out_shape=jax.ShapeDtypeStruct((B, Sq, H), query.dtype),
        grid_spec=pltpu.PrefetchScalarGridSpec(
            num_scalar_prefetch=0,
            grid=(B, nq),                                  # qi innermost (sequential)
            in_specs=[
                pl.BlockSpec((1, tq, H), lambda b, qi: (b, qi, 0)),   # query tile
                pl.BlockSpec((1, S, H), lambda b, qi: (b, 0, 0)),     # key (full, per b)
                pl.BlockSpec((1, S, H), lambda b, qi: (b, 0, 0)),     # value (full, per b)
                pl.BlockSpec((H, H), lambda b, qi: (0, 0)),           # W_k^T (bf16)
                pl.BlockSpec((1, H), lambda b, qi: (0, 0)),           # b_k (f32)
                pl.BlockSpec((H, H), lambda b, qi: (0, 0)),           # W_o^T (bf16)
                pl.BlockSpec((1, H), lambda b, qi: (0, 0)),           # b_o (f32)
            ],
            out_specs=pl.BlockSpec((1, tq, H), lambda b, qi: (b, qi, 0)),
            scratch_shapes=[
                pltpu.VMEM((S, H), jnp.bfloat16),   # projected K cache (per batch)
                pltpu.VMEM((S, H), jnp.bfloat16),   # projected V cache (per batch)
                pltpu.VMEM((tq, H), jnp.float32),   # lane-concat per-head contexts
            ]),
        compiler_params=pltpu.CompilerParams(
            # batch is parallel (v7x dual-TC sharding); qi must stay sequential
            # on one core so the cached projected K/V remains valid.
            dimension_semantics=("parallel", "arbitrary"),
            vmem_limit_bytes=64 * 1024 * 1024),
    )(query, key, value, wk_t, bk2, wo_t, bo2)


def _reference(query, key, value, w_k, b_k, w_o, b_o, *, heads):
    """Pure-JAX (f32) replica of the PyTorch forward (mask=None, dropout=identity)."""
    B, S, H = key.shape
    d = H // heads
    scale = jnp.sqrt(jnp.float32(d))

    def proj(x):
        y = x @ w_k.T + b_k                      # fc_k for q, k and v (as in torch code)
        return y.reshape(B, -1, heads, d).transpose(0, 2, 1, 3)   # (B, h, S, d)

    q = proj(query); k = proj(key); v = proj(value)
    energy = jnp.einsum('bhqd,bhkd->bhqk', q, k) / scale
    attn = jax.nn.softmax(energy, axis=-1)
    x = jnp.einsum('bhqk,bhkd->bhqd', attn, v).transpose(0, 2, 1, 3).reshape(B, -1, H)
    return x @ w_o.T + b_o


if __name__ == "__main__":
    B, S, H, HEADS = 2, 8, 128, 4
    DROPOUT = 0.0  # dropout is a no-op here (deterministic forward)

    key0 = jax.random.PRNGKey(0)
    ks = jax.random.split(key0, 8)

    # Deterministic parameter init (PyTorch Linear shapes: W [out, in], b [out]).
    bound = 1.0 / math.sqrt(float(H))
    w_k = jax.random.uniform(ks[0], (H, H), jnp.float32, -bound, bound)
    b_k = jax.random.uniform(ks[1], (H,), jnp.float32, -bound, bound)
    w_o = jax.random.uniform(ks[2], (H, H), jnp.float32, -bound, bound)
    b_o = jax.random.uniform(ks[3], (H,), jnp.float32, -bound, bound)
    # fc_q / fc_v exist in the module but are unused in forward; not materialized.

    query = jax.random.normal(ks[4], (B, S, H), jnp.float32)
    key_in = jax.random.normal(ks[5], (B, S, H), jnp.float32)
    value = jax.random.normal(ks[6], (B, S, H), jnp.float32)

    out = multi_head_attention(query, key_in, value, w_k, b_k, w_o, b_o,
                               heads=HEADS)
    out = jax.block_until_ready(out)

    ref = _reference(query, key_in, value, w_k, b_k, w_o, b_o, heads=HEADS)
    assert out.shape == (B, S, H)
    # bf16 MXU operands + approx reciprocal -> loosened tolerance vs f32 reference.
    assert jnp.allclose(out, ref, atol=3e-2, rtol=3e-2), "mismatch vs reference"

    print("KERNEL_OK")
</pallas_src>

<mosaic_0001>
module attributes {stable_mosaic.version = 11 : i64} {
  func.func @_mha_kernel(%arg0: i32, %arg1: i32, %arg2: memref<1x8x128xf32, #tpu.memory_space<vmem>>, %arg3: memref<1x8x128xf32, #tpu.memory_space<vmem>>, %arg4: memref<1x8x128xf32, #tpu.memory_space<vmem>>, %arg5: memref<128x128xbf16, #tpu.memory_space<vmem>>, %arg6: memref<1x128xf32, #tpu.memory_space<vmem>>, %arg7: memref<128x128xbf16, #tpu.memory_space<vmem>>, %arg8: memref<1x128xf32, #tpu.memory_space<vmem>>, %arg9: memref<1x8x128xf32, #tpu.memory_space<vmem>>, %arg10: memref<8x128xbf16, #tpu.memory_space<vmem>>, %arg11: memref<8x128xbf16, #tpu.memory_space<vmem>>, %arg12: memref<8x128xf32, #tpu.memory_space<vmem>>) attributes {dimension_semantics = [#tpu.dimension_semantics<parallel>, #tpu.dimension_semantics<arbitrary>], iteration_bounds = array<i64: 2, 1>, scalar_prefetch = 0 : i64, scratch_operands = 3 : i64, tpu.core_type = #tpu.core_type<tc>, window_params = [{transform_indices = @transform_0, window_bounds = array<i64: 1, 8, 128>}, {transform_indices = @transform_1, window_bounds = array<i64: 1, 8, 128>}, {transform_indices = @transform_2, window_bounds = array<i64: 1, 8, 128>}, {pipeline_mode = #tpu.pipeline_mode<synchronous>, transform_indices = @transform_3, window_bounds = array<i64: 128, 128>}, {pipeline_mode = #tpu.pipeline_mode<synchronous>, transform_indices = @transform_4, window_bounds = array<i64: 1, 128>}, {pipeline_mode = #tpu.pipeline_mode<synchronous>, transform_indices = @transform_5, window_bounds = array<i64: 128, 128>}, {pipeline_mode = #tpu.pipeline_mode<synchronous>, transform_indices = @transform_6, window_bounds = array<i64: 1, 128>}, {transform_indices = @transform_7, window_bounds = array<i64: 1, 8, 128>}]} {
    %c0 = arith.constant 0 : index
    %c0_0 = arith.constant 0 : index
    %0 = vector.load %arg5[%c0, %c0_0] : memref<128x128xbf16, #tpu.memory_space<vmem>>, vector<128x128xbf16>
    %c0_1 = arith.constant 0 : index
    %c0_2 = arith.constant 0 : index
    %1 = vector.load %arg6[%c0_1, %c0_2] : memref<1x128xf32, #tpu.memory_space<vmem>>, vector<1x128xf32>
    %c0_3 = arith.constant 0 : index
    %c0_4 = arith.constant 0 : index
    %2 = vector.load %arg7[%c0_3, %c0_4] : memref<128x128xbf16, #tpu.memory_space<vmem>>, vector<128x128xbf16>
    %c0_5 = arith.constant 0 : index
    %c0_6 = arith.constant 0 : index
    %3 = vector.load %arg8[%c0_5, %c0_6] : memref<1x128xf32, #tpu.memory_space<vmem>>, vector<1x128xf32>
    %c0_i32 = arith.constant 0 : i32
    %4 = arith.cmpi eq, %arg1, %c0_i32 : i32
    %5 = arith.extui %4 : i1 to i32
    %c0_i32_7 = arith.constant 0 : i32
    %6 = arith.cmpi ne, %5, %c0_i32_7 : i32
    scf.if %6 {
      %c0_55 = arith.constant 0 : index
      %c0_56 = arith.constant 0 : index
      %c0_57 = arith.constant 0 : index
      %95 = vector.load %arg3[%c0_55, %c0_56, %c0_57] : memref<1x8x128xf32, #tpu.memory_space<vmem>>, vector<1x8x128xf32>
      %96 = vector.shape_cast %95 : vector<1x8x128xf32> to vector<8x128xf32>
      %97 = arith.truncf %96 : vector<8x128xf32> to vector<8x128xbf16>
      %c0_58 = arith.constant 0 : index
      %c0_59 = arith.constant 0 : index
      %c0_60 = arith.constant 0 : index
      %98 = vector.load %arg4[%c0_58, %c0_59, %c0_60] : memref<1x8x128xf32, #tpu.memory_space<vmem>>, vector<1x8x128xf32>
      %99 = vector.shape_cast %98 : vector<1x8x128xf32> to vector<8x128xf32>
      %100 = arith.truncf %99 : vector<8x128xf32> to vector<8x128xbf16>
      %101 = tpu.concatenate %97, %100 in 0 : vector<8x128xbf16>, vector<8x128xbf16> -> vector<16x128xbf16>
      %cst_61 = arith.constant dense<0.000000e+00> : vector<16x128xf32>
      %102 = tpu.matmul %101, %0, %cst_61 {dimension_numbers = #tpu.dot_dimension_numbers<[1], [0], [0], [1], [0, 0, 1, 1], [], []>} : vector<16x128xbf16>, vector<128x128xbf16>, vector<16x128xf32> -> vector<16x128xf32>
      %103 = vector.broadcast %1 : vector<1x128xf32> to vector<16x128xf32>
      %104 = arith.addf %102, %103 : vector<16x128xf32>
      %105 = vector.extract_strided_slice %104 {offsets = [0, 0], sizes = [8, 128], strides = [1, 1]} : vector<16x128xf32> to vector<8x128xf32>
      %106 = arith.truncf %105 : vector<8x128xf32> to vector<8x128xbf16>
      %c0_62 = arith.constant 0 : index
      %c0_63 = arith.constant 0 : index
      %107 = vector.load %arg10[%c0_62, %c0_63] : memref<8x128xbf16, #tpu.memory_space<vmem>>, vector<8x128xbf16>
      tpu.vector_store %arg10[%c0_62, %c0_63], %106 {strides = array<i32>} : memref<8x128xbf16, #tpu.memory_space<vmem>>, vector<8x128xbf16>,
      %108 = vector.extract_strided_slice %104 {offsets = [8, 0], sizes = [8, 128], strides = [1, 1]} : vector<16x128xf32> to vector<8x128xf32>
      %109 = arith.truncf %108 : vector<8x128xf32> to vector<8x128xbf16>
      %c0_64 = arith.constant 0 : index
      %c0_65 = arith.constant 0 : index
      %110 = vector.load %arg11[%c0_64, %c0_65] : memref<8x128xbf16, #tpu.memory_space<vmem>>, vector<8x128xbf16>
      tpu.vector_store %arg11[%c0_64, %c0_65], %109 {strides = array<i32>} : memref<8x128xbf16, #tpu.memory_space<vmem>>, vector<8x128xbf16>,
    } else {
    }
    %c0_8 = arith.constant 0 : index
    %c0_9 = arith.constant 0 : index
    %c0_10 = arith.constant 0 : index
    %7 = vector.load %arg2[%c0_8, %c0_9, %c0_10] : memref<1x8x128xf32, #tpu.memory_space<vmem>>, vector<1x8x128xf32>
    %8 = vector.shape_cast %7 : vector<1x8x128xf32> to vector<8x128xf32>
    %9 = arith.truncf %8 : vector<8x128xf32> to vector<8x128xbf16>
    %cst = arith.constant dense<0.000000e+00> : vector<8x128xf32>
    %10 = tpu.matmul %9, %0, %cst {dimension_numbers = #tpu.dot_dimension_numbers<[1], [0], [0], [1], [0, 0, 1, 1], [], []>} : vector<8x128xbf16>, vector<128x128xbf16>, vector<8x128xf32> -> vector<8x128xf32>
    %11 = vector.broadcast %1 : vector<1x128xf32> to vector<8x128xf32>
    %12 = arith.addf %10, %11 : vector<8x128xf32>
    %cst_11 = arith.constant 0.176776692 : f32
    %13 = vector.broadcast %cst_11 : f32 to vector<8x128xf32>
    %14 = arith.mulf %12, %13 : vector<8x128xf32>
    %15 = vector.extract_strided_slice %14 {offsets = [0, 0], sizes = [8, 32], strides = [1, 1]} : vector<8x128xf32> to vector<8x32xf32>
    %16 = arith.truncf %15 : vector<8x32xf32> to vector<8x32xbf16>
    %c0_12 = arith.constant 0 : index
    %c0_13 = arith.constant 0 : index
    %17 = vector.load %arg10[%c0_12, %c0_13] : memref<8x128xbf16, #tpu.memory_space<vmem>>, vector<8x32xbf16>
    %c0_14 = arith.constant 0 : index
    %c0_15 = arith.constant 0 : index
    %18 = vector.load %arg11[%c0_14, %c0_15] : memref<8x128xbf16, #tpu.memory_space<vmem>>, vector<8x32xbf16>
    %cst_16 = arith.constant dense<0.000000e+00> : vector<8x8xf32>
    %19 = tpu.matmul %16, %17, %cst_16 {dimension_numbers = #tpu.dot_dimension_numbers<[1], [1], [0], [0], [0, 0, 1, 0], [], []>} : vector<8x32xbf16>, vector<8x32xbf16>, vector<8x8xf32> -> vector<8x8xf32>
    %cst_17 = arith.constant dense<0xFF800000> : vector<8xf32>
    %20 = vector.multi_reduction <maximumf>, %19, %cst_17 [1] : vector<8x8xf32> to vector<8xf32>
    %21 = vector.shape_cast %20 : vector<8xf32> to vector<8x1xf32>
    %22 = vector.broadcast %21 : vector<8x1xf32> to vector<8x8xf32>
    %23 = arith.subf %19, %22 : vector<8x8xf32>
    %24 = math.exp %23 : vector<8x8xf32>
    %cst_18 = arith.constant dense<0.000000e+00> : vector<8xf32>
    %25 = vector.multi_reduction <add>, %24, %cst_18 [1] : vector<8x8xf32> to vector<8xf32>
    %26 = vector.shape_cast %25 : vector<8xf32> to vector<8x1xf32>
    %27 = tpu.reciprocal %26 {approx = true} : vector<8x1xf32> -> vector<8x1xf32>
    %28 = vector.broadcast %27 : vector<8x1xf32> to vector<8x8xf32>
    %29 = arith.mulf %24, %28 : vector<8x8xf32>
    %30 = arith.truncf %29 : vector<8x8xf32> to vector<8x8xbf16>
    %cst_19 = arith.constant dense<0.000000e+00> : vector<8x32xf32>
    %31 = tpu.matmul %30, %18, %cst_19 {dimension_numbers = #tpu.dot_dimension_numbers<[1], [0], [0], [1], [0, 0, 1, 1], [], []>} : vector<8x8xbf16>, vector<8x32xbf16>, vector<8x32xf32> -> vector<8x32xf32>
    %c0_20 = arith.constant 0 : index
    %c0_21 = arith.constant 0 : index
    %32 = vector.load %arg12[%c0_20, %c0_21] : memref<8x128xf32, #tpu.memory_space<vmem>>, vector<8x32xf32>
    tpu.vector_store %arg12[%c0_20, %c0_21], %31 {strides = array<i32>} : memref<8x128xf32, #tpu.memory_space<vmem>>, vector<8x32xf32>,
    %33 = vector.extract_strided_slice %14 {offsets = [0, 32], sizes = [8, 32], strides = [1, 1]} : vector<8x128xf32> to vector<8x32xf32>
    %34 = arith.truncf %33 : vector<8x32xf32> to vector<8x32xbf16>
    %c0_22 = arith.constant 0 : index
    %c32 = arith.constant 32 : index
    %35 = vector.load %arg10[%c0_22, %c32] : memref<8x128xbf16, #tpu.memory_space<vmem>>, vector<8x32xbf16>
    %c0_23 = arith.constant 0 : index
    %c32_24 = arith.constant 32 : index
    %36 = vector.load %arg11[%c0_23, %c32_24] : memref<8x128xbf16, #tpu.memory_space<vmem>>, vector<8x32xbf16>
    %cst_25 = arith.constant dense<0.000000e+00> : vector<8x8xf32>
    %37 = tpu.matmul %34, %35, %cst_25 {dimension_numbers = #tpu.dot_dimension_numbers<[1], [1], [0], [0], [0, 0, 1, 0], [], []>} : vector<8x32xbf16>, vector<8x32xbf16>, vector<8x8xf32> -> vector<8x8xf32>
    %cst_26 = arith.constant dense<0xFF800000> : vector<8xf32>
    %38 = vector.multi_reduction <maximumf>, %37, %cst_26 [1] : vector<8x8xf32> to vector<8xf32>
    %39 = vector.shape_cast %38 : vector<8xf32> to vector<8x1xf32>
    %40 = vector.broadcast %39 : vector<8x1xf32> to vector<8x8xf32>
    %41 = arith.subf %37, %40 : vector<8x8xf32>
    %42 = math.exp %41 : vector<8x8xf32>
    %cst_27 = arith.constant dense<0.000000e+00> : vector<8xf32>
    %43 = vector.multi_reduction <add>, %42, %cst_27 [1] : vector<8x8xf32> to vector<8xf32>
    %44 = vector.shape_cast %43 : vector<8xf32> to vector<8x1xf32>
    %45 = tpu.reciprocal %44 {approx = true} : vector<8x1xf32> -> vector<8x1xf32>
    %46 = vector.broadcast %45 : vector<8x1xf32> to vector<8x8xf32>
    %47 = arith.mulf %42, %46 : vector<8x8xf32>
    %48 = arith.truncf %47 : vector<8x8xf32> to vector<8x8xbf16>
    %cst_28 = arith.constant dense<0.000000e+00> : vector<8x32xf32>
    %49 = tpu.matmul %48, %36, %cst_28 {dimension_numbers = #tpu.dot_dimension_numbers<[1], [0], [0], [1], [0, 0, 1, 1], [], []>} : vector<8x8xbf16>, vector<8x32xbf16>, vector<8x32xf32> -> vector<8x32xf32>
    %c0_29 = arith.constant 0 : index
    %c32_30 = arith.constant 32 : index
    %50 = vector.load %arg12[%c0_29, %c32_30] : memref<8x128xf32, #tpu.memory_space<vmem>>, vector<8x32xf32>
    tpu.vector_store %arg12[%c0_29, %c32_30], %49 {strides = array<i32>} : memref<8x128xf32, #tpu.memory_space<vmem>>, vector<8x32xf32>,
    %51 = vector.extract_strided_slice %14 {offsets = [0, 64], sizes = [8, 32], strides = [1, 1]} : vector<8x128xf32> to vector<8x32xf32>
    %52 = arith.truncf %51 : vector<8x32xf32> to vector<8x32xbf16>
    %c0_31 = arith.constant 0 : index
    %c64 = arith.constant 64 : index
    %53 = vector.load %arg10[%c0_31, %c64] : memref<8x128xbf16, #tpu.memory_space<vmem>>, vector<8x32xbf16>
    %c0_32 = arith.constant 0 : index
    %c64_33 = arith.constant 64 : index
    %54 = vector.load %arg11[%c0_32, %c64_33] : memref<8x128xbf16, #tpu.memory_space<vmem>>, vector<8x32xbf16>
    %cst_34 = arith.constant dense<0.000000e+00> : vector<8x8xf32>
    %55 = tpu.matmul %52, %53, %cst_34 {dimension_numbers = #tpu.dot_dimension_numbers<[1], [1], [0], [0], [0, 0, 1, 0], [], []>} : vector<8x32xbf16>, vector<8x32xbf16>, vector<8x8xf32> -> vector<8x8xf32>
    %cst_35 = arith.constant dense<0xFF800000> : vector<8xf32>
    %56 = vector.multi_reduction <maximumf>, %55, %cst_35 [1] : vector<8x8xf32> to vector<8xf32>
    %57 = vector.shape_cast %56 : vector<8xf32> to vector<8x1xf32>
    %58 = vector.broadcast %57 : vector<8x1xf32> to vector<8x8xf32>
    %59 = arith.subf %55, %58 : vector<8x8xf32>
    %60 = math.exp %59 : vector<8x8xf32>
    %cst_36 = arith.constant dense<0.000000e+00> : vector<8xf32>
    %61 = vector.multi_reduction <add>, %60, %cst_36 [1] : vector<8x8xf32> to vector<8xf32>
    %62 = vector.shape_cast %61 : vector<8xf32> to vector<8x1xf32>
    %63 = tpu.reciprocal %62 {approx = true} : vector<8x1xf32> -> vector<8x1xf32>
    %64 = vector.broadcast %63 : vector<8x1xf32> to vector<8x8xf32>
    %65 = arith.mulf %60, %64 : vector<8x8xf32>
    %66 = arith.truncf %65 : vector<8x8xf32> to vector<8x8xbf16>
    %cst_37 = arith.constant dense<0.000000e+00> : vector<8x32xf32>
    %67 = tpu.matmul %66, %54, %cst_37 {dimension_numbers = #tpu.dot_dimension_numbers<[1], [0], [0], [1], [0, 0, 1, 1], [], []>} : vector<8x8xbf16>, vector<8x32xbf16>, vector<8x32xf32> -> vector<8x32xf32>
    %c0_38 = arith.constant 0 : index
    %c64_39 = arith.constant 64 : index
    %68 = vector.load %arg12[%c0_38, %c64_39] : memref<8x128xf32, #tpu.memory_space<vmem>>, vector<8x32xf32>
    tpu.vector_store %arg12[%c0_38, %c64_39], %67 {strides = array<i32>} : memref<8x128xf32, #tpu.memory_space<vmem>>, vector<8x32xf32>,
    %69 = vector.extract_strided_slice %14 {offsets = [0, 96], sizes = [8, 32], strides = [1, 1]} : vector<8x128xf32> to vector<8x32xf32>
    %70 = arith.truncf %69 : vector<8x32xf32> to vector<8x32xbf16>
    %c0_40 = arith.constant 0 : index
    %c96 = arith.constant 96 : index
    %71 = vector.load %arg10[%c0_40, %c96] : memref<8x128xbf16, #tpu.memory_space<vmem>>, vector<8x32xbf16>
    %c0_41 = arith.constant 0 : index
    %c96_42 = arith.constant 96 : index
    %72 = vector.load %arg11[%c0_41, %c96_42] : memref<8x128xbf16, #tpu.memory_space<vmem>>, vector<8x32xbf16>
    %cst_43 = arith.constant dense<0.000000e+00> : vector<8x8xf32>
    %73 = tpu.matmul %70, %71, %cst_43 {dimension_numbers = #tpu.dot_dimension_numbers<[1], [1], [0], [0], [0, 0, 1, 0], [], []>} : vector<8x32xbf16>, vector<8x32xbf16>, vector<8x8xf32> -> vector<8x8xf32>
    %cst_44 = arith.constant dense<0xFF800000> : vector<8xf32>
    %74 = vector.multi_reduction <maximumf>, %73, %cst_44 [1] : vector<8x8xf32> to vector<8xf32>
    %75 = vector.shape_cast %74 : vector<8xf32> to vector<8x1xf32>
    %76 = vector.broadcast %75 : vector<8x1xf32> to vector<8x8xf32>
    %77 = arith.subf %73, %76 : vector<8x8xf32>
    %78 = math.exp %77 : vector<8x8xf32>
    %cst_45 = arith.constant dense<0.000000e+00> : vector<8xf32>
    %79 = vector.multi_reduction <add>, %78, %cst_45 [1] : vector<8x8xf32> to vector<8xf32>
    %80 = vector.shape_cast %79 : vector<8xf32> to vector<8x1xf32>
    %81 = tpu.reciprocal %80 {approx = true} : vector<8x1xf32> -> vector<8x1xf32>
    %82 = vector.broadcast %81 : vector<8x1xf32> to vector<8x8xf32>
    %83 = arith.mulf %78, %82 : vector<8x8xf32>
    %84 = arith.truncf %83 : vector<8x8xf32> to vector<8x8xbf16>
    %cst_46 = arith.constant dense<0.000000e+00> : vector<8x32xf32>
    %85 = tpu.matmul %84, %72, %cst_46 {dimension_numbers = #tpu.dot_dimension_numbers<[1], [0], [0], [1], [0, 0, 1, 1], [], []>} : vector<8x8xbf16>, vector<8x32xbf16>, vector<8x32xf32> -> vector<8x32xf32>
    %c0_47 = arith.constant 0 : index
    %c96_48 = arith.constant 96 : index
    %86 = vector.load %arg12[%c0_47, %c96_48] : memref<8x128xf32, #tpu.memory_space<vmem>>, vector<8x32xf32>
    tpu.vector_store %arg12[%c0_47, %c96_48], %85 {strides = array<i32>} : memref<8x128xf32, #tpu.memory_space<vmem>>, vector<8x32xf32>,
    %c0_49 = arith.constant 0 : index
    %c0_50 = arith.constant 0 : index
    %87 = vector.load %arg12[%c0_49, %c0_50] : memref<8x128xf32, #tpu.memory_space<vmem>>, vector<8x128xf32>
    %88 = arith.truncf %87 : vector<8x128xf32> to vector<8x128xbf16>
    %cst_51 = arith.constant dense<0.000000e+00> : vector<8x128xf32>
    %89 = tpu.matmul %88, %2, %cst_51 {dimension_numbers = #tpu.dot_dimension_numbers<[1], [0], [0], [1], [0, 0, 1, 1], [], []>} : vector<8x128xbf16>, vector<128x128xbf16>, vector<8x128xf32> -> vector<8x128xf32>
    %90 = vector.broadcast %3 : vector<1x128xf32> to vector<8x128xf32>
    %91 = arith.addf %89, %90 : vector<8x128xf32>
    %c0_52 = arith.constant 0 : index
    %c0_53 = arith.constant 0 : index
    %c0_54 = arith.constant 0 : index
    %92 = vector.load %arg9[%c0_52, %c0_53, %c0_54] : memref<1x8x128xf32, #tpu.memory_space<vmem>>, vector<1x8x128xf32>
    %93 = vector.shape_cast %92 : vector<1x8x128xf32> to vector<8x128xf32>
    %94 = vector.shape_cast %91 : vector<8x128xf32> to vector<1x8x128xf32>
    tpu.vector_store %arg9[%c0_52, %c0_53, %c0_54], %94 {strides = array<i32>} : memref<1x8x128xf32, #tpu.memory_space<vmem>>, vector<1x8x128xf32>,
    return
  }
  func.func @transform_0(%arg0: i32, %arg1: i32) -> (i32, i32, i32) {
    %c0_i32 = arith.constant 0 : i32
    %c0_i32_0 = arith.constant 0 : i32
    return %arg0, %arg1, %c0_i32 : i32, i32, i32
  }
  func.func @transform_1(%arg0: i32, %arg1: i32) -> (i32, i32, i32) {
    %c0_i32 = arith.constant 0 : i32
    %c0_i32_0 = arith.constant 0 : i32
    %c0_i32_1 = arith.constant 0 : i32
    return %arg0, %c0_i32, %c0_i32_0 : i32, i32, i32
  }
  func.func @transform_2(%arg0: i32, %arg1: i32) -> (i32, i32, i32) {
    %c0_i32 = arith.constant 0 : i32
    %c0_i32_0 = arith.constant 0 : i32
    %c0_i32_1 = arith.constant 0 : i32
    return %arg0, %c0_i32, %c0_i32_0 : i32, i32, i32
  }
  func.func @transform_3(%arg0: i32, %arg1: i32) -> (i32, i32) {
    %c0_i32 = arith.constant 0 : i32
    %c0_i32_0 = arith.constant 0 : i32
    %c0_i32_1 = arith.constant 0 : i32
    return %c0_i32, %c0_i32_0 : i32, i32
  }
  func.func @transform_4(%arg0: i32, %arg1: i32) -> (i32, i32) {
    %c0_i32 = arith.constant 0 : i32
    %c0_i32_0 = arith.constant 0 : i32
    %c0_i32_1 = arith.constant 0 : i32
    return %c0_i32, %c0_i32_0 : i32, i32
  }
  func.func @transform_5(%arg0: i32, %arg1: i32) -> (i32, i32) {
    %c0_i32 = arith.constant 0 : i32
    %c0_i32_0 = arith.constant 0 : i32
    %c0_i32_1 = arith.constant 0 : i32
    return %c0_i32, %c0_i32_0 : i32, i32
  }
  func.func @transform_6(%arg0: i32, %arg1: i32) -> (i32, i32) {
    %c0_i32 = arith.constant 0 : i32
    %c0_i32_0 = arith.constant 0 : i32
    %c0_i32_1 = arith.constant 0 : i32
    return %c0_i32, %c0_i32_0 : i32, i32
  }
  func.func @transform_7(%arg0: i32, %arg1: i32) -> (i32, i32, i32) {
    %c0_i32 = arith.constant 0 : i32
    %c0_i32_0 = arith.constant 0 : i32
    return %arg0, %arg1, %c0_i32 : i32, i32, i32
  }
}

</mosaic_0001>

<llo_original>
// kernel: tpu_custom_call.1
$region0: #{tpu_custom_call.1}
  #allocation0 [shape = 'u32[]', space=smem, size = 0x4, offset = 0x4, fixed_abs, tag = 'smem constant byte address 0x4 - core index']
  #allocation1 [shape = 'u32[72,128]{1,0:T(1,128)}', space=vmem, size = 0x9000, scoped, tag = 'internal scratch']
  #allocation2 [shape = 'bf16[8,128]{1,0:T(8,128)(2,1)}', space=vmem, size = 0x800, scoped, tag = 'scratch operand']
  #allocation3 [shape = 'bf16[8,128]{1,0:T(8,128)(2,1)}', space=vmem, size = 0x800, scoped, tag = 'scratch operand']
  #allocation4 [shape = 'f32[8,128]{1,0:T(8,128)}', space=vmem, size = 0x1000, scoped, tag = 'scratch operand']
  %s0 = inlined_call_operand.hbm [shape: f32[2,8,128], index: 0, kind: input, shape index: {}]
  %s1 = inlined_call_operand.hbm [shape: f32[2,8,128], index: 1, kind: input, shape index: {}]
  %s2 = inlined_call_operand.hbm [shape: f32[2,8,128], index: 2, kind: input, shape index: {}]
  %s3 = inlined_call_operand.hbm [shape: bf16[128,128], index: 3, kind: input, shape index: {}]
  %s4 = inlined_call_operand.vmem [shape: f32[1,128], index: 4, kind: input, shape index: {}]
  %s5 = inlined_call_operand.hbm [shape: bf16[128,128], index: 5, kind: input, shape index: {}]
  %s6 = inlined_call_operand.vmem [shape: f32[1,128], index: 6, kind: input, shape index: {}]
  %s7 = inlined_call_operand.hbm [shape: f32[2,8,128], index: 7, kind: output, shape index: {}]
  %s8 = sld [smem:[#allocation0]]
  $region85: #{tpu_custom_call.1} parent=0
    _
  %s10 = ssub.s32 1, %s8
  %s11 = scalar_select 0, %s10, %s8
  $region1: #{tpu_custom_call.1} parent=0
    #allocation5 [shape = 'u8[8192]{0}', space=vmem, size = 0x2000, scoped, tag = 'input window, operand 0']
    #allocation6 [shape = 's32[2]{0}', space=sflag, size = 0x8, scoped, tag = 'scoped memory for tpu_custom_call.1']
    #allocation7 [shape = 's32[2]{0}', space=sflag, size = 0x8, scoped, tag = 'scoped memory for tpu_custom_call.1']
    #allocation8 [shape = 'u8[8192]{0}', space=vmem, size = 0x2000, scoped, tag = 'input window, operand 1']
    #allocation9 [shape = 's32[2]{0}', space=sflag, size = 0x8, scoped, tag = 'scoped memory for tpu_custom_call.1']
    #allocation10 [shape = 'u8[8192]{0}', space=vmem, size = 0x2000, scoped, tag = 'input window, operand 2']
    #allocation11 [shape = 'u8[32768]{0}', space=vmem, size = 0x8000, scoped, tag = 'input window, operand 3, single buffered']
    #allocation12 [shape = 's32[1]{0}', space=sflag, size = 0x4, scoped, tag = 'scoped memory for tpu_custom_call.1']
    #allocation13 [shape = 'u8[32768]{0}', space=vmem, size = 0x8000, scoped, tag = 'input window, operand 5, single buffered']
    #allocation14 [shape = 'u8[8192]{0}', space=vmem, size = 0x2000, scoped, tag = 'output window, operand 0']
    %12 = vsyncpa [#allocation6], 0
    %s13 = scalar_lea.sflag [#allocation6], 1
    %14 = vsyncpa %s13, 0
    %15 = vsyncpa [#allocation9], 0
    %s16 = scalar_lea.sflag [#allocation9], 1
    %17 = vsyncpa %s16, 0
    %18 = vsyncpa [#allocation12], 0
    %19 = vsyncpa [#allocation7], 0
    %s20 = scalar_lea.sflag [#allocation7], 1
    %21 = vsyncpa %s20, 0
    loop: start=0, step=1, limit=4
    $region2: #{tpu_custom_call.1} parent=1 // loop_pre_header
      _
    $region3: #{tpu_custom_call.1} parent=1 // loop_header
      %s23 = sphi 0, %s27
      %p24 = scmp.ge.s32.totalorder %s23, 4
      %s30 = sphi 0, %s42
      %s31 = sphi 0, %s38
      %s32 = sphi 0, %s30
      %s33 = sphi 0, %s31
      %s34 = sphi 0, %s32
      %s35 = sphi 0, %s33
      %s47 = sphi 0, %s49
      %s50 = sphi 0, %s47
      %s51 = sphi 0, %s50
      %s67 = sphi 0, %s51
      %s73 = sphi 0, %s75
      %s76 = sphi 0, %s73
      %s77 = sphi 0, %s76
      %s93 = sphi 0, %s77
      %s99 = sphi 0, %s101
      %s102 = sphi 0, %s99
      %s103 = sphi 0, %s102
      %s119 = sphi 0, %s103
      %s123 = sphi 0, %s123
      %s125 = sphi 0, %s123
      %s126 = sphi 0, %s125
      %s140 = sphi 0, %s126
      %s144 = sphi 0, %s144
      %s146 = sphi 0, %s144
      %s147 = sphi 0, %s146
      %s161 = sphi 0, %s147
      %s165 = sphi 0, %s165
      %s167 = sphi 0, %s165
      %s168 = sphi 0, %s167
      %s182 = sphi 0, %s168
      %s186 = sphi 0, %s186
      %s188 = sphi 0, %s186
      %s189 = sphi 0, %s188
      %s203 = sphi 0, %s189
      %s211 = sphi 0, %s213
      %s214 = sphi 0, %s211
      %s215 = sphi 0, %s214
      %s231 = sphi 0, %s215
    $region4: #{tpu_custom_call.1} parent=1 // loop_header_branch
      %26 = sbr.rel (%p24) target = $region8
    $region5: #{tpu_custom_call.1} parent=1 // loop_body
      %s28 = ssub.s32 %s23, 1
      %s29 = ssub.s32 %s23, 2
      %s36 = sadd.s32 1, %s31
      %p37 = scmp.ge.s32.totalorder %s36, 1
      %s38 = scalar_select %p37, 0, %s36
      %s39 = sadd.s32 1, %s30
      %s40 = scalar_select %p37, %s39, %s30
      %p41 = scmp.ge.s32.totalorder %s40, 2
      %s42 = scalar_select %p41, 0, %s40
      %s43 = ssub.s32 %s30, %s42
      %s44 = ssub.s32 %s31, %s38
      %s45 = sor.u32 %s43, %s44
      %p46 = scmp.eq.s32.totalorder %s45, 0
      %s48 = sadd.s32 %s47, 1
      %s49 = scalar_select %p46, %s47, %s48
      %p52 = pneg %p46
      %p53 = scmp.eq.s32.totalorder %s23, 1
      %p54 = por %p52, %p53
      %p55 = scmp.ne.s32.totalorder %s47, %s50
      %p56 = scmp.eq.s32.totalorder %s23, 0
      %p57 = por %p55, %p56
      %p58 = scmp.ne.s32.totalorder %s47, %s50
      %p59 = scmp.eq.s32.totalorder %s28, 1
      %p60 = por %p58, %p59
      %p61 = scmp.ne.s32.totalorder %s50, %s51
      %p62 = scmp.eq.s32.totalorder %s28, 0
      %p63 = por %p61, %p62
      %p64 = scmp.ne.s32.totalorder %s50, %s51
      %p65 = scmp.eq.s32.totalorder %s29, 1
      %p66 = por %p64, %p65
      %p68 = scmp.ne.s32.totalorder %s51, %s67
      %p69 = scmp.eq.s32.totalorder %s29, 0
      %p70 = por %p68, %p69
      %s71 = ssub.s32 %s30, %s42
      %p72 = scmp.eq.s32.totalorder %s71, 0
      %s74 = sadd.s32 %s73, 1
      %s75 = scalar_select %p72, %s73, %s74
      %p78 = pneg %p72
      %p79 = scmp.eq.s32.totalorder %s23, 1
      %p80 = por %p78, %p79
      %p81 = scmp.ne.s32.totalorder %s73, %s76
      %p82 = scmp.eq.s32.totalorder %s23, 0
      %p83 = por %p81, %p82
      %p84 = scmp.ne.s32.totalorder %s73, %s76
      %p85 = scmp.eq.s32.totalorder %s28, 1
      %p86 = por %p84, %p85
      %p87 = scmp.ne.s32.totalorder %s76, %s77
      %p88 = scmp.eq.s32.totalorder %s28, 0
      %p89 = por %p87, %p88
      %p90 = scmp.ne.s32.totalorder %s76, %s77
      %p91 = scmp.eq.s32.totalorder %s29, 1
      %p92 = por %p90, %p91
      %p94 = scmp.ne.s32.totalorder %s77, %s93
      %p95 = scmp.eq.s32.totalorder %s29, 0
      %p96 = por %p94, %p95
      %s97 = ssub.s32 %s30, %s42
      %p98 = scmp.eq.s32.totalorder %s97, 0
      %s100 = sadd.s32 %s99, 1
      %s101 = scalar_select %p98, %s99, %s100
      %p104 = pneg %p98
      %p105 = scmp.eq.s32.totalorder %s23, 1
      %p106 = por %p104, %p105
      %p107 = scmp.ne.s32.totalorder %s99, %s102
      %p108 = scmp.eq.s32.totalorder %s23, 0
      %p109 = por %p107, %p108
      %p110 = scmp.ne.s32.totalorder %s99, %s102
      %p111 = scmp.eq.s32.totalorder %s28, 1
      %p112 = por %p110, %p111
      %p113 = scmp.ne.s32.totalorder %s102, %s103
      %p114 = scmp.eq.s32.totalorder %s28, 0
      %p115 = por %p113, %p114
      %p116 = scmp.ne.s32.totalorder %s102, %s103
      %p117 = scmp.eq.s32.totalorder %s29, 1
      %p118 = por %p116, %p117
      %p120 = scmp.ne.s32.totalorder %s103, %s119
      %p121 = scmp.eq.s32.totalorder %s29, 0
      %p122 = por %p120, %p121
      %s124 = sadd.s32 %s123, 1
      %p127 = scmp.eq.s32.totalorder %s23, 1
      %p128 = scmp.ne.s32.totalorder %s123, %s125
      %p129 = scmp.eq.s32.totalorder %s23, 0
      %p130 = por %p128, %p129
      %p131 = scmp.ne.s32.totalorder %s123, %s125
      %p132 = scmp.eq.s32.totalorder %s28, 1
      %p133 = por %p131, %p132
      %p134 = scmp.ne.s32.totalorder %s125, %s126
      %p135 = scmp.eq.s32.totalorder %s28, 0
      %p136 = por %p134, %p135
      %p137 = scmp.ne.s32.totalorder %s125, %s126
      %p138 = scmp.eq.s32.totalorder %s29, 1
      %p139 = por %p137, %p138
      %p141 = scmp.ne.s32.totalorder %s126, %s140
      %p142 = scmp.eq.s32.totalorder %s29, 0
      %p143 = por %p141, %p142
      %s145 = sadd.s32 %s144, 1
      %p148 = scmp.eq.s32.totalorder %s23, 1
      %p149 = scmp.ne.s32.totalorder %s144, %s146
      %p150 = scmp.eq.s32.totalorder %s23, 0
      %p151 = por %p149, %p150
      %p152 = scmp.ne.s32.totalorder %s144, %s146
      %p153 = scmp.eq.s32.totalorder %s28, 1
      %p154 = por %p152, %p153
      %p155 = scmp.ne.s32.totalorder %s146, %s147
      %p156 = scmp.eq.s32.totalorder %s28, 0
      %p157 = por %p155, %p156
      %p158 = scmp.ne.s32.totalorder %s146, %s147
      %p159 = scmp.eq.s32.totalorder %s29, 1
      %p160 = por %p158, %p159
      %p162 = scmp.ne.s32.totalorder %s147, %s161
      %p163 = scmp.eq.s32.totalorder %s29, 0
      %p164 = por %p162, %p163
      %s166 = sadd.s32 %s165, 1
      %p169 = scmp.eq.s32.totalorder %s23, 1
      %p170 = scmp.ne.s32.totalorder %s165, %s167
      %p171 = scmp.eq.s32.totalorder %s23, 0
      %p172 = por %p170, %p171
      %p173 = scmp.ne.s32.totalorder %s165, %s167
      %p174 = scmp.eq.s32.totalorder %s28, 1
      %p175 = por %p173, %p174
      %p176 = scmp.ne.s32.totalorder %s167, %s168
      %p177 = scmp.eq.s32.totalorder %s28, 0
      %p178 = por %p176, %p177
      %p179 = scmp.ne.s32.totalorder %s167, %s168
      %p180 = scmp.eq.s32.totalorder %s29, 1
      %p181 = por %p179, %p180
      %p183 = scmp.ne.s32.totalorder %s168, %s182
      %p184 = scmp.eq.s32.totalorder %s29, 0
      %p185 = por %p183, %p184
      %s187 = sadd.s32 %s186, 1
      %p190 = scmp.eq.s32.totalorder %s23, 1
      %p191 = scmp.ne.s32.totalorder %s186, %s188
      %p192 = scmp.eq.s32.totalorder %s23, 0
      %p193 = por %p191, %p192
      %p194 = scmp.ne.s32.totalorder %s186, %s188
      %p195 = scmp.eq.s32.totalorder %s28, 1
      %p196 = por %p194, %p195
      %p197 = scmp.ne.s32.totalorder %s188, %s189
      %p198 = scmp.eq.s32.totalorder %s28, 0
      %p199 = por %p197, %p198
      %p200 = scmp.ne.s32.totalorder %s188, %s189
      %p201 = scmp.eq.s32.totalorder %s29, 1
      %p202 = por %p200, %p201
      %p204 = scmp.ne.s32.totalorder %s189, %s203
      %p205 = scmp.eq.s32.totalorder %s29, 0
      %p206 = por %p204, %p205
      %s207 = ssub.s32 %s30, %s42
      %s208 = ssub.s32 %s31, %s38
      %s209 = sor.u32 %s207, %s208
      %p210 = scmp.eq.s32.totalorder %s209, 0
      %s212 = sadd.s32 %s211, 1
      %s213 = scalar_select %p210, %s211, %s212
      %p216 = pneg %p210
      %p217 = scmp.eq.s32.totalorder %s23, 1
      %p218 = por %p216, %p217
      %p219 = scmp.ne.s32.totalorder %s211, %s214
      %p220 = scmp.eq.s32.totalorder %s23, 0
      %p221 = por %p219, %p220
      %p222 = scmp.ne.s32.totalorder %s211, %s214
      %p223 = scmp.eq.s32.totalorder %s28, 1
      %p224 = por %p222, %p223
      %p225 = scmp.ne.s32.totalorder %s214, %s215
      %p226 = scmp.eq.s32.totalorder %s28, 0
      %p227 = por %p225, %p226
      %p228 = scmp.ne.s32.totalorder %s214, %s215
      %p229 = scmp.eq.s32.totalorder %s29, 1
      %p230 = por %p228, %p229
      %p232 = scmp.ne.s32.totalorder %s215, %s231
      %p233 = scmp.eq.s32.totalorder %s29, 0
      %p234 = por %p232, %p233
      %p235 = scmp.le.s32.totalorder 1, %s23
      %p236 = scmp.lt.s32.totalorder %s23, 3
      %p237 = pnand %p235, %p236
      %p238 = pneg %p237
      // Predicated region
      $region9: #{tpu_custom_call.1} parent=5 // pred_check
        _
      $region10: #{tpu_custom_call.1} parent=5 // pred_check_branch
        %240 = sbr.rel (%p237) target = $region12
      $region11: #{tpu_custom_call.1} parent=5 // pred_region
        %s241 = ssub.s32 %s23, 1
        // Predicated region
        $region13: #{tpu_custom_call.1} parent=11 // pred_check
          %p242 = pneg %p136
        $region14: #{tpu_custom_call.1} parent=11 // pred_check_branch
          %244 = sbr.rel (%p242) target = $region16
        $region15: #{tpu_custom_call.1} parent=11 // pred_region
          %246 = vsyncadd [#allocation12], 0
          %s247 = sshll.u32 %s3, 4
          %s248 = int_to_ptr.hbm [resolvable:$true] %s247
          %s249 = sshll.u32 [#allocation11], 4
          %s250 = int_to_ptr.vmem [resolvable:$true] %s249
          %255 = dma.hbm_to_vmem [thread:$0]  %s248, 1024, %s250, [#allocation12], 64, 64, 4
        $region16: #{tpu_custom_call.1} parent=11 // pred_fallthru
          _
        // Predicated region
        $region17: #{tpu_custom_call.1} parent=11 // pred_check
          %p256 = pneg %p157
        $region18: #{tpu_custom_call.1} parent=11 // pred_check_branch
          %258 = sbr.rel (%p256) target = $region20
        $region19: #{tpu_custom_call.1} parent=11 // pred_region
          _
        $region20: #{tpu_custom_call.1} parent=11 // pred_fallthru
          _
        // Predicated region
        $region21: #{tpu_custom_call.1} parent=11 // pred_check
          %p259 = pneg %p178
        $region22: #{tpu_custom_call.1} parent=11 // pred_check_branch
          %261 = sbr.rel (%p259) target = $region24
        $region23: #{tpu_custom_call.1} parent=11 // pred_region
          %263 = vsyncadd [#allocation12], 0
          %s264 = sshll.u32 %s5, 4
          %s265 = int_to_ptr.hbm [resolvable:$true] %s264
          %s266 = sshll.u32 [#allocation13], 4
          %s267 = int_to_ptr.vmem [resolvable:$true] %s266
          %272 = dma.hbm_to_vmem [thread:$0]  %s265, 1024, %s267, [#allocation12], 64, 64, 4
        $region24: #{tpu_custom_call.1} parent=11 // pred_fallthru
          _
        // Predicated region
        $region25: #{tpu_custom_call.1} parent=11 // pred_check
          %p273 = pneg %p199
        $region26: #{tpu_custom_call.1} parent=11 // pred_check_branch
          %275 = sbr.rel (%p273) target = $region28
        $region27: #{tpu_custom_call.1} parent=11 // pred_region
          _
        $region28: #{tpu_custom_call.1} parent=11 // pred_fallthru
          _
      $region12: #{tpu_custom_call.1} parent=5 // pred_fallthru
        _
      %p276 = scmp.lt.s32.totalorder %s23, 2
      // Predicated region
      $region29: #{tpu_custom_call.1} parent=5 // pred_check
        %p277 = pneg %p276
      $region30: #{tpu_custom_call.1} parent=5 // pred_check_branch
        %279 = sbr.rel (%p277) target = $region32
      $region31: #{tpu_custom_call.1} parent=5 // pred_region
        // Predicated region
        $region33: #{tpu_custom_call.1} parent=31 // pred_check
          %p280 = pneg %p57
        $region34: #{tpu_custom_call.1} parent=31 // pred_check_branch
          %282 = sbr.rel (%p280) target = $region36
        $region35: #{tpu_custom_call.1} parent=31 // pred_region
          %s283 = sand.u32 %s47, 1
          %s284 = scalar_lea.sflag [#allocation6], %s283
          %s285 = sand.u32 %s47, 1
          %s286 = smul.addr %s285, 8
          %s287 = scalar_lea.vmem [#allocation5], %s286
          %289 = vsyncadd %s284, 0
          %s290 = sadd.s32 %s31, %s30
          %s291 = smul.addr %s290, 8
          %s292 = scalar_lea.hbm %s0, %s291
          %s294 = sshll.u32 %s292, 4
          %s295 = int_to_ptr.hbm [resolvable:$true] %s294
          %s296 = sshll.u32 %s287, 4
          %s297 = int_to_ptr.vmem [resolvable:$true] %s296
          %299 = dma.hbm_to_vmem [thread:$0]  %s295, 128, %s297, %s284
        $region36: #{tpu_custom_call.1} parent=31 // pred_fallthru
          _
        // Predicated region
        $region37: #{tpu_custom_call.1} parent=31 // pred_check
          %p300 = pneg %p83
        $region38: #{tpu_custom_call.1} parent=31 // pred_check_branch
          %302 = sbr.rel (%p300) target = $region40
        $region39: #{tpu_custom_call.1} parent=31 // pred_region
          %s303 = sand.u32 %s23, 1
          %s304 = scalar_lea.sflag [#allocation9], %s303
          %s305 = sand.u32 %s73, 1
          %s306 = smul.addr %s305, 8
          %s307 = scalar_lea.vmem [#allocation8], %s306
          %309 = vsyncadd %s304, 0
          %s310 = smul.addr %s30, 8
          %s311 = scalar_lea.hbm %s1, %s310
          %s313 = sshll.u32 %s311, 4
          %s314 = int_to_ptr.hbm [resolvable:$true] %s313
          %s315 = sshll.u32 %s307, 4
          %s316 = int_to_ptr.vmem [resolvable:$true] %s315
          %318 = dma.hbm_to_vmem [thread:$0]  %s314, 128, %s316, %s304
        $region40: #{tpu_custom_call.1} parent=31 // pred_fallthru
          _
        // Predicated region
        $region41: #{tpu_custom_call.1} parent=31 // pred_check
          %p319 = pneg %p109
        $region42: #{tpu_custom_call.1} parent=31 // pred_check_branch
          %321 = sbr.rel (%p319) target = $region44
        $region43: #{tpu_custom_call.1} parent=31 // pred_region
          %s322 = sand.u32 %s23, 1
          %s323 = scalar_lea.sflag [#allocation9], %s322
          %s324 = sand.u32 %s99, 1
          %s325 = smul.addr %s324, 8
          %s326 = scalar_lea.vmem [#allocation10], %s325
          %328 = vsyncadd %s323, 0
          %s329 = smul.addr %s30, 8
          %s330 = scalar_lea.hbm %s2, %s329
          %s332 = sshll.u32 %s330, 4
          %s333 = int_to_ptr.hbm [resolvable:$true] %s332
          %s334 = sshll.u32 %s326, 4
          %s335 = int_to_ptr.vmem [resolvable:$true] %s334
          %337 = dma.hbm_to_vmem [thread:$0]  %s333, 128, %s335, %s323
        $region44: #{tpu_custom_call.1} parent=31 // pred_fallthru
          _
      $region32: #{tpu_custom_call.1} parent=5 // pred_fallthru
        _
      %p338 = scmp.le.s32.totalorder 1, %s23
      %p339 = scmp.lt.s32.totalorder %s23, 3
      %p340 = pnand %p338, %p339
      %p341 = pneg %p340
      // Predicated region
      $region45: #{tpu_custom_call.1} parent=5 // pred_check
        _
      $region46: #{tpu_custom_call.1} parent=5 // pred_check_branch
        %343 = sbr.rel (%p340) target = $region48
      $region47: #{tpu_custom_call.1} parent=5 // pred_region
        %s344 = ssub.s32 %s23, 1
        %s345 = sand.u32 %s50, 1
        %s346 = scalar_lea.sflag [#allocation6], %s345
        %s347 = sand.u32 %s50, 1
        %s348 = smul.addr %s347, 8
        %s349 = scalar_lea.vmem [#allocation5], %s348
        // Predicated region
        $region49: #{tpu_custom_call.1} parent=47 // pred_check
          %p350 = pneg %p63
        $region50: #{tpu_custom_call.1} parent=47 // pred_check_branch
          %352 = sbr.rel (%p350) target = $region52
        $region51: #{tpu_custom_call.1} parent=47 // pred_region
          %354 = dma.done %s346, 128
        $region52: #{tpu_custom_call.1} parent=47 // pred_fallthru
          _
        %s355 = sand.u32 %s28, 1
        %s356 = scalar_lea.sflag [#allocation9], %s355
        %s357 = sand.u32 %s76, 1
        %s358 = smul.addr %s357, 8
        %s359 = scalar_lea.vmem [#allocation8], %s358
        // Predicated region
        $region53: #{tpu_custom_call.1} parent=47 // pred_check
          %p360 = pneg %p89
        $region54: #{tpu_custom_call.1} parent=47 // pred_check_branch
          %362 = sbr.rel (%p360) target = $region56
        $region55: #{tpu_custom_call.1} parent=47 // pred_region
          %364 = dma.done %s356, 128
        $region56: #{tpu_custom_call.1} parent=47 // pred_fallthru
          _
        %s365 = sand.u32 %s28, 1
        %s366 = scalar_lea.sflag [#allocation9], %s365
        %s367 = sand.u32 %s102, 1
        %s368 = smul.addr %s367, 8
        %s369 = scalar_lea.vmem [#allocation10], %s368
        // Predicated region
        $region57: #{tpu_custom_call.1} parent=47 // pred_check
          %p370 = pneg %p115
        $region58: #{tpu_custom_call.1} parent=47 // pred_check_branch
          %372 = sbr.rel (%p370) target = $region60
        $region59: #{tpu_custom_call.1} parent=47 // pred_region
          %374 = dma.done %s366, 128
        $region60: #{tpu_custom_call.1} parent=47 // pred_fallthru
          _
        // Predicated region
        $region61: #{tpu_custom_call.1} parent=47 // pred_check
          %p375 = pneg %p136
        $region62: #{tpu_custom_call.1} parent=47 // pred_check_branch
          %377 = sbr.rel (%p375) target = $region64
        $region63: #{tpu_custom_call.1} parent=47 // pred_region
          %379 = dma.done [#allocation12], 1024
        $region64: #{tpu_custom_call.1} parent=47 // pred_fallthru
          _
        // Predicated region
        $region65: #{tpu_custom_call.1} parent=47 // pred_check
          %p380 = pneg %p178
        $region66: #{tpu_custom_call.1} parent=47 // pred_check_branch
          %382 = sbr.rel (%p380) target = $region68
        $region67: #{tpu_custom_call.1} parent=47 // pred_region
          %384 = dma.done [#allocation12], 1024
        $region68: #{tpu_custom_call.1} parent=47 // pred_fallthru
          _
        %s385 = sand.u32 %s50, 1
        %s386 = scalar_lea.sflag [#allocation6], %s385
        %s387 = sand.u32 %s50, 1
        %s388 = smul.addr %s387, 8
        %s389 = scalar_lea.vmem [#allocation5], %s388
        %p390 = pneg %p63
        %p391 = pneg %p60
        %s392 = sand.u32 %s28, 1
        %s393 = scalar_lea.sflag [#allocation9], %s392
        %s394 = sand.u32 %s76, 1
        %s395 = smul.addr %s394, 8
        %s396 = scalar_lea.vmem [#allocation8], %s395
        %p397 = pneg %p89
        %p398 = pneg %p86
        %s399 = sand.u32 %s28, 1
        %s400 = scalar_lea.sflag [#allocation9], %s399
        %s401 = sand.u32 %s102, 1
        %s402 = smul.addr %s401, 8
        %s403 = scalar_lea.vmem [#allocation10], %s402
        %p404 = pneg %p115
        %p405 = pneg %p112
        %p406 = pneg %p136
        %p407 = pneg %p133
        %p408 = pneg %p157
        %p409 = pneg %p154
        %p410 = pneg %p178
        %p411 = pneg %p175
        %p412 = pneg %p199
        %p413 = pneg %p196
        %p414 = pneg %p227
        %p415 = pneg %p224
        %s416 = sand.u32 %s214, 1
        %s417 = scalar_lea.sflag [#allocation7], %s416
        %s418 = sand.u32 %s214, 1
        %s419 = smul.addr %s418, 8
        %s420 = scalar_lea.vmem [#allocation14], %s419
        %v422 = vld [vmem:[#allocation11] sm:$0xf]
        %v423 = vld [vmem:[#allocation11 + $0x4] sm:$0xf]
        %v424 = vld [vmem:[#allocation11 + $0x8] sm:$0xf]
        %v425 = vld [vmem:[#allocation11 + $0xc] sm:$0xf]
        %v426 = vld [vmem:[#allocation11 + $0x10] sm:$0xf]
        %v427 = vld [vmem:[#allocation11 + $0x14] sm:$0xf]
        %v428 = vld [vmem:[#allocation11 + $0x18] sm:$0xf]
        %v429 = vld [vmem:[#allocation11 + $0x1c] sm:$0xf]
        %v430 = vld [vmem:[#allocation11 + $0x20] sm:$0xf]
        %v431 = vld [vmem:[#allocation11 + $0x24] sm:$0xf]
        %v432 = vld [vmem:[#allocation11 + $0x28] sm:$0xf]
        %v433 = vld [vmem:[#allocation11 + $0x2c] sm:$0xf]
        %v434 = vld [vmem:[#allocation11 + $0x30] sm:$0xf]
        %v435 = vld [vmem:[#allocation11 + $0x34] sm:$0xf]
        %v436 = vld [vmem:[#allocation11 + $0x38] sm:$0xf]
        %v437 = vld [vmem:[#allocation11 + $0x3c] sm:$0xf]
        %v438 = vld [vmem:[%s4] sm:$0x1]
        %v439 = vld [vmem:[#allocation13] sm:$0xf]
        %v440 = vld [vmem:[#allocation13 + $0x4] sm:$0xf]
        %v441 = vld [vmem:[#allocation13 + $0x8] sm:$0xf]
        %v442 = vld [vmem:[#allocation13 + $0xc] sm:$0xf]
        %v443 = vld [vmem:[#allocation13 + $0x10] sm:$0xf]
        %v444 = vld [vmem:[#allocation13 + $0x14] sm:$0xf]
        %v445 = vld [vmem:[#allocation13 + $0x18] sm:$0xf]
        %v446 = vld [vmem:[#allocation13 + $0x1c] sm:$0xf]
        %v447 = vld [vmem:[#allocation13 + $0x20] sm:$0xf]
        %v448 = vld [vmem:[#allocation13 + $0x24] sm:$0xf]
        %v449 = vld [vmem:[#allocation13 + $0x28] sm:$0xf]
        %v450 = vld [vmem:[#allocation13 + $0x2c] sm:$0xf]
        %v451 = vld [vmem:[#allocation13 + $0x30] sm:$0xf]
        %v452 = vld [vmem:[#allocation13 + $0x34] sm:$0xf]
        %v453 = vld [vmem:[#allocation13 + $0x38] sm:$0xf]
        %v454 = vld [vmem:[#allocation13 + $0x3c] sm:$0xf]
        %v455 = vld [vmem:[%s6] sm:$0x1]
        %p456 = scmp.eq.s32.totalorder %s33, 0
        // Predicated region
        $region69: #{tpu_custom_call.1} parent=47 // pred_check
          %p457 = pneg %p456
        $region70: #{tpu_custom_call.1} parent=47 // pred_check_branch
          %459 = sbr.rel (%p457) target = $region72
        $region71: #{tpu_custom_call.1} parent=47 // pred_region
          %v460 = vld [vmem:[%s359] sm:$0xff]
          %v461 = vpack.c.bf16 %v460, %v460
          %v462 = vld [vmem:[%s369] sm:$0xff]
          %v463 = vpack.c.bf16 %v462, %v462
          %v465 = vunpack.c.l.b16 %v463
          %v466 = vpack.c.b16 %v465, %v465
          %vm467 = vcmask 1043456
          %v470 = vsel %vm467, %v461, %v466
          %v473 = vperm.slane %v438, 0
          %v491 = vunpack.c.l.b16 %v422
          %v492 = vunpack.c.l.b16 %v423
          %v493 = vunpack.c.l.b16 %v424
          %v494 = vunpack.c.l.b16 %v425
          %v495 = vunpack.c.l.b16 %v426
          %v496 = vunpack.c.l.b16 %v427
          %v497 = vunpack.c.l.b16 %v428
          %v498 = vunpack.c.l.b16 %v429
          %v499 = vunpack.c.l.b16 %v430
          %v500 = vunpack.c.l.b16 %v431
          %v501 = vunpack.c.l.b16 %v432
          %v502 = vunpack.c.l.b16 %v433
          %v503 = vunpack.c.l.b16 %v434
          %v504 = vunpack.c.l.b16 %v435
          %v505 = vunpack.c.l.b16 %v436
          %v506 = vunpack.c.l.b16 %v437
          %v507 = vpack.c.b16 %v492, %v491
          %v508 = vpack.c.b16 %v494, %v493
          %v509 = vpack.c.b16 %v496, %v495
          %v510 = vpack.c.b16 %v498, %v497
          %v511 = vpack.c.b16 %v500, %v499
          %v512 = vpack.c.b16 %v502, %v501
          %v513 = vpack.c.b16 %v504, %v503
          %v514 = vpack.c.b16 %v506, %v505
          %523 = vmatpush.bf16.msra.mxu0 %v514
          %524 = vmatpush.bf16.msra.mxu0 %v513
          %525 = vmatpush.bf16.msra.mxu0 %v512
          %526 = vmatpush.bf16.msra.mxu0 %v511
          %527 = vmatpush.bf16.msra.mxu0 %v510
          %528 = vmatpush.bf16.msra.mxu0 %v509
          %529 = vmatpush.bf16.msra.mxu0 %v508
          %530 = vmatpush.bf16.msra.mxu0 %v507
          %531 = vmatmul.bf16.gmra.mxu0 %v470
          %v532 = vpop.f32.mrf.mxu0
          %v533 = vadd.f32 %v473, %v532
          %v534 = vpop.f32.mrf.mxu0
          %v535 = vadd.f32 %v473, %v534
          %536 = vdwg.mxu0
          %v537 = vpack.c.bf16 %v533, %v533
          %538 = vst [vmem:[#allocation2] sm:$0xf] %v537
          %v539 = vpack.c.bf16 %v535, %v535
          %540 = vst [vmem:[#allocation3] sm:$0xf] %v539
        $region72: #{tpu_custom_call.1} parent=47 // pred_fallthru
          _
        %v541 = vld [vmem:[%s349] sm:$0xff]
        %v542 = vpack.c.bf16 %v541, %v541
        %v544 = vperm.slane %v438, 0
        %v562 = vunpack.c.l.b16 %v422
        %v563 = vunpack.c.l.b16 %v423
        %v564 = vunpack.c.l.b16 %v424
        %v565 = vunpack.c.l.b16 %v425
        %v566 = vunpack.c.l.b16 %v426
        %v567 = vunpack.c.l.b16 %v427
        %v568 = vunpack.c.l.b16 %v428
        %v569 = vunpack.c.l.b16 %v429
        %v570 = vunpack.c.l.b16 %v430
        %v571 = vunpack.c.l.b16 %v431
        %v572 = vunpack.c.l.b16 %v432
        %v573 = vunpack.c.l.b16 %v433
        %v574 = vunpack.c.l.b16 %v434
        %v575 = vunpack.c.l.b16 %v435
        %v576 = vunpack.c.l.b16 %v436
        %v577 = vunpack.c.l.b16 %v437
        %v578 = vpack.c.b16 %v563, %v562
        %v579 = vpack.c.b16 %v565, %v564
        %v580 = vpack.c.b16 %v567, %v566
        %v581 = vpack.c.b16 %v569, %v568
        %v582 = vpack.c.b16 %v571, %v570
        %v583 = vpack.c.b16 %v573, %v572
        %v584 = vpack.c.b16 %v575, %v574
        %v585 = vpack.c.b16 %v577, %v576
        %594 = vmatpush.bf16.msra.mxu0 %v585
        %595 = vmatpush.bf16.msra.mxu0 %v584
        %596 = vmatpush.bf16.msra.mxu0 %v583
        %597 = vmatpush.bf16.msra.mxu0 %v582
        %598 = vmatpush.bf16.msra.mxu0 %v581
        %599 = vmatpush.bf16.msra.mxu0 %v580
        %600 = vmatpush.bf16.msra.mxu0 %v579
        %601 = vmatpush.bf16.msra.mxu0 %v578
        %602 = vmatmul.bf16.gmra.mxu0 %v542
        %v603 = vpop.f32.mrf.mxu0
        %v604 = vadd.f32 %v544, %v603
        %v605 = vpop.f32.mrf.mxu0
        %606 = vdwg.mxu0
        %v607 = vmul.f32 %v604, 0.17677669
        %v608 = vpack.c.bf16 %v607, %v607
        %v609 = vld [vmem:[#allocation2] sm:$0xf]
        %v610 = vld [vmem:[#allocation3] sm:$0xf]
        %vm611 = vcmask 261120
        %v613 = vsel %vm611, %v608, 0
        %v616 = vsel %vm611, %v609, 0
        %618 = vmatpush.bf16.xpose.msra.mxu0 0
        %619 = vmatpush.bf16.xpose.msra.mxu0 0
        %620 = vmatpush.bf16.xpose.msra.mxu0 0
        %621 = vmatpush.bf16.xpose.msra.mxu0 0
        %622 = vmatpush.bf16.xpose.msra.mxu0 0
        %623 = vmatpush.bf16.xpose.msra.mxu0 0
        %624 = vmatpush.bf16.xpose.msra.mxu0 0
        %625 = vmatpush.bf16.xpose.msra.mxu0 %v616
        %626 = vmatmul.bf16.gmra.mxu0 %v613
        %v627 = vpop.f32.mrf.mxu0
        %v628 = vadd.f32 0.0, %v627
        %v629 = vpop.f32.mrf.mxu0
        %630 = vdwg.mxu0
        %vm631 = vcmask 64512
        %v632 = vsel %vm631, %v628, -inf
        %633 = vmax.xlane.f32.xlu0 %v632
        %v634 = vpop.xlane.xlu0 %633
        %v635 = vsub.f32 %v628, %v634
        %v636 = vmul.f32 %v635, 1.442695
        %v637 = vpow.pop %v636
        %v638 = vsel %vm631, %v637, 0.0
        %639 = vadd.xlane.f32.xlu0 %v638
        %v640 = vpop.xlane.xlu0 %639
        %v641 = vrcp.pop %v640
        %v642 = vmul.f32 %v637, %v641
        %v643 = vpack.c.bf16 %v642, %v642
        %v645 = vsel %vm631, %v643, 0
        %vm647 = vcmask 1043456
        %v649 = vsel %vm647, %v610, 0
        %651 = vmatpush.bf16.msra.mxu0 0
        %652 = vmatpush.bf16.msra.mxu0 0
        %653 = vmatpush.bf16.msra.mxu0 0
        %654 = vmatpush.bf16.msra.mxu0 0
        %655 = vmatpush.bf16.msra.mxu0 0
        %656 = vmatpush.bf16.msra.mxu0 0
        %657 = vmatpush.bf16.msra.mxu0 0
        %658 = vmatpush.bf16.msra.mxu0 %v649
        %659 = vmatmul.bf16.gmra.mxu0 %v645
        %v660 = vpop.f32.mrf.mxu0
        %v661 = vadd.f32 0.0, %v660
        %v662 = vpop.f32.mrf.mxu0
        %663 = vdwg.mxu0
        %664 = vst.msk [vmem:[#allocation4] sm:$0xff] %vm611, %v661
        %v665 = vld [vmem:[#allocation2] sm:$0xf]
        %v666 = vld [vmem:[#allocation3] sm:$0xf]
        %668 = vrot.lane.b32.xlu0 %v608, 96
        %v669 = vpop.permute.xlu0 %668
        %v671 = vunpack.c.l.b16 %v665
        %v672 = vpack.c.b16 %v671, %v671
        %673 = vrot.lane.b32.xlu0 %v672, 96
        %v674 = vpop.permute.xlu0 %673
        %v676 = vsel %vm611, %v669, 0
        %v679 = vsel %vm611, %v674, 0
        %681 = vmatpush.bf16.xpose.msra.mxu0 0
        %682 = vmatpush.bf16.xpose.msra.mxu0 0
        %683 = vmatpush.bf16.xpose.msra.mxu0 0
        %684 = vmatpush.bf16.xpose.msra.mxu0 0
        %685 = vmatpush.bf16.xpose.msra.mxu0 0
        %686 = vmatpush.bf16.xpose.msra.mxu0 0
        %687 = vmatpush.bf16.xpose.msra.mxu0 0
        %688 = vmatpush.bf16.xpose.msra.mxu0 %v679
        %689 = vmatmul.bf16.gmra.mxu0 %v676
        %v690 = vpop.f32.mrf.mxu0
        %v691 = vadd.f32 0.0, %v690
        %v692 = vpop.f32.mrf.mxu0
        %693 = vdwg.mxu0
        %v694 = vsel %vm631, %v691, -inf
        %695 = vmax.xlane.f32.xlu0 %v694
        %v696 = vpop.xlane.xlu0 %695
        %v697 = vsub.f32 %v691, %v696
        %v698 = vmul.f32 %v697, 1.442695
        %v699 = vpow.pop %v698
        %v700 = vsel %vm631, %v699, 0.0
        %701 = vadd.xlane.f32.xlu0 %v700
        %v702 = vpop.xlane.xlu0 %701
        %v703 = vrcp.pop %v702
        %v704 = vmul.f32 %v699, %v703
        %v705 = vpack.c.bf16 %v704, %v704
        %v707 = vunpack.c.l.b16 %v666
        %v708 = vpack.c.b16 %v707, %v707
        %709 = vrot.lane.b32.xlu0 %v708, 96
        %v710 = vpop.permute.xlu0 %709
        %v712 = vsel %vm631, %v705, 0
        %v715 = vsel %vm647, %v710, 0
        %717 = vmatpush.bf16.msra.mxu0 0
        %718 = vmatpush.bf16.msra.mxu0 0
        %719 = vmatpush.bf16.msra.mxu0 0
        %720 = vmatpush.bf16.msra.mxu0 0
        %721 = vmatpush.bf16.msra.mxu0 0
        %722 = vmatpush.bf16.msra.mxu0 0
        %723 = vmatpush.bf16.msra.mxu0 0
        %724 = vmatpush.bf16.msra.mxu0 %v715
        %725 = vmatmul.bf16.gmra.mxu0 %v712
        %v726 = vpop.f32.mrf.mxu0
        %v727 = vadd.f32 0.0, %v726
        %v728 = vpop.f32.mrf.mxu0
        %729 = vdwg.mxu0
        %731 = vrot.lane.b32.xlu0 %v727, 32
        %v732 = vpop.permute.xlu0 %731
        %vm734 = vcmask 523520
        %735 = vst.msk [vmem:[#allocation4] sm:$0xff] %vm734, %v732
        %v736 = vld [vmem:[#allocation2] sm:$0xf]
        %v737 = vld [vmem:[#allocation3] sm:$0xf]
        %738 = vrot.lane.b32.xlu0 %v608, 64
        %v739 = vpop.permute.xlu0 %738
        %v741 = vunpack.c.l.b16 %v736
        %v742 = vpack.c.b16 %v741, %v741
        %743 = vrot.lane.b32.xlu0 %v742, 64
        %v744 = vpop.permute.xlu0 %743
        %v746 = vsel %vm611, %v739, 0
        %v749 = vsel %vm611, %v744, 0
        %751 = vmatpush.bf16.xpose.msra.mxu0 0
        %752 = vmatpush.bf16.xpose.msra.mxu0 0
        %753 = vmatpush.bf16.xpose.msra.mxu0 0
        %754 = vmatpush.bf16.xpose.msra.mxu0 0
        %755 = vmatpush.bf16.xpose.msra.mxu0 0
        %756 = vmatpush.bf16.xpose.msra.mxu0 0
        %757 = vmatpush.bf16.xpose.msra.mxu0 0
        %758 = vmatpush.bf16.xpose.msra.mxu0 %v749
        %759 = vmatmul.bf16.gmra.mxu0 %v746
        %v760 = vpop.f32.mrf.mxu0
        %v761 = vadd.f32 0.0, %v760
        %v762 = vpop.f32.mrf.mxu0
        %763 = vdwg.mxu0
        %v764 = vsel %vm631, %v761, -inf
        %765 = vmax.xlane.f32.xlu0 %v764
        %v766 = vpop.xlane.xlu0 %765
        %v767 = vsub.f32 %v761, %v766
        %v768 = vmul.f32 %v767, 1.442695
        %v769 = vpow.pop %v768
        %v770 = vsel %vm631, %v769, 0.0
        %771 = vadd.xlane.f32.xlu0 %v770
        %v772 = vpop.xlane.xlu0 %771
        %v773 = vrcp.pop %v772
        %v774 = vmul.f32 %v769, %v773
        %v775 = vpack.c.bf16 %v774, %v774
        %v777 = vunpack.c.l.b16 %v737
        %v778 = vpack.c.b16 %v777, %v777
        %779 = vrot.lane.b32.xlu0 %v778, 64
        %v780 = vpop.permute.xlu0 %779
        %v782 = vsel %vm631, %v775, 0
        %v785 = vsel %vm647, %v780, 0
        %787 = vmatpush.bf16.msra.mxu0 0
        %788 = vmatpush.bf16.msra.mxu0 0
        %789 = vmatpush.bf16.msra.mxu0 0
        %790 = vmatpush.bf16.msra.mxu0 0
        %791 = vmatpush.bf16.msra.mxu0 0
        %792 = vmatpush.bf16.msra.mxu0 0
        %793 = vmatpush.bf16.msra.mxu0 0
        %794 = vmatpush.bf16.msra.mxu0 %v785
        %795 = vmatmul.bf16.gmra.mxu0 %v782
        %v796 = vpop.f32.mrf.mxu0
        %v797 = vadd.f32 0.0, %v796
        %v798 = vpop.f32.mrf.mxu0
        %799 = vdwg.mxu0
        %801 = vrot.lane.b32.xlu0 %v797, 64
        %v802 = vpop.permute.xlu0 %801
        %vm804 = vcmask 785920
        %805 = vst.msk [vmem:[#allocation4] sm:$0xff] %vm804, %v802
        %v806 = vld [vmem:[#allocation2] sm:$0xf]
        %v807 = vld [vmem:[#allocation3] sm:$0xf]
        %808 = vrot.lane.b32.xlu0 %v608, 32
        %v809 = vpop.permute.xlu0 %808
        %v811 = vunpack.c.l.b16 %v806
        %v812 = vpack.c.b16 %v811, %v811
        %813 = vrot.lane.b32.xlu0 %v812, 32
        %v814 = vpop.permute.xlu0 %813
        %v816 = vsel %vm611, %v809, 0
        %v819 = vsel %vm611, %v814, 0
        %821 = vmatpush.bf16.xpose.msra.mxu0 0
        %822 = vmatpush.bf16.xpose.msra.mxu0 0
        %823 = vmatpush.bf16.xpose.msra.mxu0 0
        %824 = vmatpush.bf16.xpose.msra.mxu0 0
        %825 = vmatpush.bf16.xpose.msra.mxu0 0
        %826 = vmatpush.bf16.xpose.msra.mxu0 0
        %827 = vmatpush.bf16.xpose.msra.mxu0 0
        %828 = vmatpush.bf16.xpose.msra.mxu0 %v819
        %829 = vmatmul.bf16.gmra.mxu0 %v816
        %v830 = vpop.f32.mrf.mxu0
        %v831 = vadd.f32 0.0, %v830
        %v832 = vpop.f32.mrf.mxu0
        %833 = vdwg.mxu0
        %v834 = vsel %vm631, %v831, -inf
        %835 = vmax.xlane.f32.xlu0 %v834
        %v836 = vpop.xlane.xlu0 %835
        %v837 = vsub.f32 %v831, %v836
        %v838 = vmul.f32 %v837, 1.442695
        %v839 = vpow.pop %v838
        %v840 = vsel %vm631, %v839, 0.0
        %841 = vadd.xlane.f32.xlu0 %v840
        %v842 = vpop.xlane.xlu0 %841
        %v843 = vrcp.pop %v842
        %v844 = vmul.f32 %v839, %v843
        %v845 = vpack.c.bf16 %v844, %v844
        %v847 = vunpack.c.l.b16 %v807
        %v848 = vpack.c.b16 %v847, %v847
        %849 = vrot.lane.b32.xlu0 %v848, 32
        %v850 = vpop.permute.xlu0 %849
        %v852 = vsel %vm631, %v845, 0
        %v855 = vsel %vm647, %v850, 0
        %857 = vmatpush.bf16.msra.mxu0 0
        %858 = vmatpush.bf16.msra.mxu0 0
        %859 = vmatpush.bf16.msra.mxu0 0
        %860 = vmatpush.bf16.msra.mxu0 0
        %861 = vmatpush.bf16.msra.mxu0 0
        %862 = vmatpush.bf16.msra.mxu0 0
        %863 = vmatpush.bf16.msra.mxu0 0
        %864 = vmatpush.bf16.msra.mxu0 %v855
        %865 = vmatmul.bf16.gmra.mxu0 %v852
        %v866 = vpop.f32.mrf.mxu0
        %v867 = vadd.f32 0.0, %v866
        %v868 = vpop.f32.mrf.mxu0
        %869 = vdwg.mxu0
        %871 = vrot.lane.b32.xlu0 %v867, 96
        %v872 = vpop.permute.xlu0 %871
        %vm874 = vcmask 1048320
        %875 = vst.msk [vmem:[#allocation4] sm:$0xff] %vm874, %v872
        %v876 = vld [vmem:[#allocation4] sm:$0xff]
        %v877 = vpack.c.bf16 %v876, %v876
        %v879 = vperm.slane %v455, 0
        %v897 = vunpack.c.l.b16 %v439
        %v898 = vunpack.c.l.b16 %v440
        %v899 = vunpack.c.l.b16 %v441
        %v900 = vunpack.c.l.b16 %v442
        %v901 = vunpack.c.l.b16 %v443
        %v902 = vunpack.c.l.b16 %v444
        %v903 = vunpack.c.l.b16 %v445
        %v904 = vunpack.c.l.b16 %v446
        %v905 = vunpack.c.l.b16 %v447
        %v906 = vunpack.c.l.b16 %v448
        %v907 = vunpack.c.l.b16 %v449
        %v908 = vunpack.c.l.b16 %v450
        %v909 = vunpack.c.l.b16 %v451
        %v910 = vunpack.c.l.b16 %v452
        %v911 = vunpack.c.l.b16 %v453
        %v912 = vunpack.c.l.b16 %v454
        %v913 = vpack.c.b16 %v898, %v897
        %v914 = vpack.c.b16 %v900, %v899
        %v915 = vpack.c.b16 %v902, %v901
        %v916 = vpack.c.b16 %v904, %v903
        %v917 = vpack.c.b16 %v906, %v905
        %v918 = vpack.c.b16 %v908, %v907
        %v919 = vpack.c.b16 %v910, %v909
        %v920 = vpack.c.b16 %v912, %v911
        %929 = vmatpush.bf16.msra.mxu0 %v920
        %930 = vmatpush.bf16.msra.mxu0 %v919
        %931 = vmatpush.bf16.msra.mxu0 %v918
        %932 = vmatpush.bf16.msra.mxu0 %v917
        %933 = vmatpush.bf16.msra.mxu0 %v916
        %934 = vmatpush.bf16.msra.mxu0 %v915
        %935 = vmatpush.bf16.msra.mxu0 %v914
        %936 = vmatpush.bf16.msra.mxu0 %v913
        %937 = vmatmul.bf16.gmra.mxu0 %v877
        %v938 = vpop.f32.mrf.mxu0
        %v939 = vadd.f32 %v879, %v938
        %v940 = vpop.f32.mrf.mxu0
        %941 = vdwg.mxu0
        %942 = vst [vmem:[%s420] sm:$0xff] %v939
        %s943 = sand.u32 %s214, 1
        %s944 = scalar_lea.sflag [#allocation7], %s943
        %s945 = sand.u32 %s214, 1
        %s946 = smul.addr %s945, 8
        %s947 = scalar_lea.vmem [#allocation14], %s946
        // Predicated region
        $region73: #{tpu_custom_call.1} parent=47 // pred_check
          %p948 = pneg %p224
        $region74: #{tpu_custom_call.1} parent=47 // pred_check_branch
          %950 = sbr.rel (%p948) target = $region76
        $region75: #{tpu_custom_call.1} parent=47 // pred_region
          %952 = vsyncadd %s944, 0
          %s953 = sadd.s32 %s33, %s32
          %s954 = smul.addr %s953, 8
          %s955 = scalar_lea.hbm %s7, %s954
          %s957 = sshll.u32 %s947, 4
          %s958 = int_to_ptr.vmem [resolvable:$true] %s957
          %s959 = sshll.u32 %s955, 4
          %s960 = int_to_ptr.hbm [resolvable:$true] %s959
          %962 = dma.vmem_to_hbm [thread:$0]  %s958, 128, %s960, %s944
        $region76: #{tpu_custom_call.1} parent=47 // pred_fallthru
          _
      $region48: #{tpu_custom_call.1} parent=5 // pred_fallthru
        _
      %p963 = scmp.le.s32.totalorder 2, %s23
      // Predicated region
      $region77: #{tpu_custom_call.1} parent=5 // pred_check
        %p964 = pneg %p963
      $region78: #{tpu_custom_call.1} parent=5 // pred_check_branch
        %966 = sbr.rel (%p964) target = $region80
      $region79: #{tpu_custom_call.1} parent=5 // pred_region
        %s967 = ssub.s32 %s23, 2
        // Predicated region
        $region81: #{tpu_custom_call.1} parent=79 // pred_check
          %p968 = pneg %p230
        $region82: #{tpu_custom_call.1} parent=79 // pred_check_branch
          %970 = sbr.rel (%p968) target = $region84
        $region83: #{tpu_custom_call.1} parent=79 // pred_region
          %s971 = sand.u32 %s215, 1
          %s972 = scalar_lea.sflag [#allocation7], %s971
          %s973 = sand.u32 %s215, 1
          %s974 = smul.addr %s973, 8
          %s975 = scalar_lea.vmem [#allocation14], %s974
          %977 = dma.done %s972, 128
        $region84: #{tpu_custom_call.1} parent=79 // pred_fallthru
          _
      $region80: #{tpu_custom_call.1} parent=5 // pred_fallthru
        _
    $region6: #{tpu_custom_call.1} parent=1 // loop_footer
      %s27 = sadd.s32 1, %s23
    $region7: #{tpu_custom_call.1} parent=1 // loop_footer_branch
      %22 = sbr.rel target = $region3
    $region8: #{tpu_custom_call.1} parent=1 // loop_exit
      _
    %978 = vsyncpa [#allocation6], 1
    %s979 = scalar_lea.sflag [#allocation6], 1
    %980 = vsyncpa %s979, 1
    %981 = vsyncpa [#allocation9], 1
    %s982 = scalar_lea.sflag [#allocation9], 1
    %983 = vsyncpa %s982, 1
    %984 = vsyncpa [#allocation12], 1
    %985 = vsyncpa [#allocation7], 1
    %s986 = scalar_lea.sflag [#allocation7], 1
    %987 = vsyncpa %s986, 1

</llo_original>
